<compile_context>
chip_gen: v7x
topology: tpu7x:2x2x1
jax: 0.10.0
libtpu: 0.0.40
codegen_flags: <defaults>
</compile_context>

<pallas_src>
import jax
import jax.numpy as jnp
from jax import lax
from jax.experimental import pallas as pl
from jax.experimental.pallas import tpu as pltpu

HIDDEN = 1600   # nn.Linear(in_dim, 1600)
OUT = 1         # nn.Linear(1600, 1)


def _network_kernel(x_ref, w_ref, b_ref, o_ref):
    """Collapsed Network.forward: y = x @ (W1 @ w2) + (b1 @ w2 + b2).

    x_ref : (B, K) f32  — full-resident input block
    w_ref : (1, K) f32  — collapsed effective weight row, (W1 @ w2)^T
    b_ref : (1, 1) f32  — collapsed effective bias, b1 @ w2 + b2
    o_ref : (B, 1) f32
    """
    prod = x_ref[...] * w_ref[...]                     # VPU elementwise (B, K)
    y = jnp.sum(prod, axis=-1, keepdims=True)          # XLU row reduce -> (B, 1)
    o_ref[...] = (y + b_ref[...]).astype(o_ref.dtype)


def prepare_params(w1, b1, w2, b2):
    """One-time algebraic collapse of fc1 + fc2 into a single affine map.

    fc2(fc1(x)) = (x W1 + b1) w2 + b2 = x (W1 w2) + (b1 w2 + b2)
    Computed in f32 at HIGHEST precision so accuracy is >= the original
    two-matmul evaluation order.
    """
    w_eff = jnp.dot(w1, w2, precision=lax.Precision.HIGHEST)            # (K, OUT)
    b_eff = (jnp.dot(b1.reshape(1, HIDDEN), w2,
                     precision=lax.Precision.HIGHEST)
             + b2.reshape(1, OUT))                                      # (1, OUT)
    w_row = jnp.asarray(w_eff.T, jnp.float32)                           # (OUT, K) == (1, K)
    b_eff = jnp.asarray(b_eff, jnp.float32)                             # (1, 1)
    return w_row, b_eff


@jax.jit
def network_forward(x, w_row, b_eff):
    """x: [B, K] f32; w_row: [1, K] f32; b_eff: [1, 1] f32 -> [B, 1] f32."""
    B, K = x.shape
    assert w_row.shape == (OUT, K) and b_eff.shape == (OUT, OUT)
    return pl.pallas_call(
        _network_kernel,
        out_shape=jax.ShapeDtypeStruct((B, OUT), jnp.float32),
        grid=(1,),
        in_specs=[
            pl.BlockSpec((B, K), lambda i: (0, 0)),      # x, fully resident
            pl.BlockSpec((1, K), lambda i: (0, 0)),      # collapsed weight row
            pl.BlockSpec((1, OUT), lambda i: (0, 0)),    # collapsed bias
        ],
        out_specs=pl.BlockSpec((B, OUT), lambda i: (0, 0)),
        compiler_params=pltpu.CompilerParams(
            dimension_semantics=("arbitrary",)),
    )(x, w_row, b_eff)


def init_params(key, in_dim):
    """Deterministic init mimicking nn.Linear defaults (U(-1/sqrt(fan_in), ..))."""
    k1, k2, k3, k4 = jax.random.split(key, 4)
    lim1 = 1.0 / jnp.sqrt(in_dim)
    lim2 = 1.0 / jnp.sqrt(HIDDEN)
    w1 = jax.random.uniform(k1, (in_dim, HIDDEN), jnp.float32, -lim1, lim1)
    b1 = jax.random.uniform(k2, (HIDDEN,), jnp.float32, -lim1, lim1)
    w2 = jax.random.uniform(k3, (HIDDEN, OUT), jnp.float32, -lim2, lim2)
    b2 = jax.random.uniform(k4, (OUT,), jnp.float32, -lim2, lim2)
    return w1, b1, w2, b2


if __name__ == "__main__":
    # Real dataset feature dim: 2 (handcrafted) + 4096 (InferSent) + 300 (GloVe) = 4398.
    B, IN_DIM = 8, 4398

    key = jax.random.PRNGKey(0)
    kx, kp = jax.random.split(key)
    x = jax.random.normal(kx, (B, IN_DIM), jnp.float32)
    w1, b1, w2, b2 = init_params(kp, IN_DIM)

    # One-time collapse of the parameters (not inside the per-call path).
    w_row, b_eff = prepare_params(w1, b1, w2, b2)

    out = network_forward(x, w_row, b_eff)
    out = jax.block_until_ready(out)

    # Pure-f32 reference evaluated in the original two-matmul order.
    h_ref = jnp.dot(x, w1, precision=lax.Precision.HIGHEST) + b1
    ref = jnp.dot(h_ref, w2, precision=lax.Precision.HIGHEST) + b2

    assert out.shape == (B, OUT)
    assert jnp.allclose(out, ref, rtol=2e-3, atol=2e-3), (out, ref)

    print("KERNEL_OK")
</pallas_src>

<mosaic_0001>
module attributes {stable_mosaic.version = 11 : i64} {
  func.func @_network_kernel(%arg0: i32, %arg1: memref<8x4398xf32, #tpu.memory_space<vmem>>, %arg2: memref<1x4398xf32, #tpu.memory_space<vmem>>, %arg3: memref<1x1xf32, #tpu.memory_space<vmem>>, %arg4: memref<8x1xf32, #tpu.memory_space<vmem>>) attributes {dimension_semantics = [#tpu.dimension_semantics<arbitrary>], iteration_bounds = array<i64: 1>, scalar_prefetch = 0 : i64, scratch_operands = 0 : i64, tpu.core_type = #tpu.core_type<tc>, window_params = [{pipeline_mode = #tpu.pipeline_mode<synchronous>, transform_indices = @transform_0, window_bounds = array<i64: 8, 4398>}, {pipeline_mode = #tpu.pipeline_mode<synchronous>, transform_indices = @transform_1, window_bounds = array<i64: 1, 4398>}, {pipeline_mode = #tpu.pipeline_mode<synchronous>, transform_indices = @transform_2, window_bounds = array<i64: 1, 1>}, {pipeline_mode = #tpu.pipeline_mode<synchronous>, transform_indices = @transform_3, window_bounds = array<i64: 8, 1>}]} {
    %c0 = arith.constant 0 : index
    %c0_0 = arith.constant 0 : index
    %0 = vector.load %arg1[%c0, %c0_0] : memref<8x4398xf32, #tpu.memory_space<vmem>>, vector<8x4398xf32>
    %c0_1 = arith.constant 0 : index
    %c0_2 = arith.constant 0 : index
    %1 = vector.load %arg2[%c0_1, %c0_2] : memref<1x4398xf32, #tpu.memory_space<vmem>>, vector<1x4398xf32>
    %2 = vector.broadcast %1 : vector<1x4398xf32> to vector<8x4398xf32>
    %3 = arith.mulf %0, %2 : vector<8x4398xf32>
    %cst = arith.constant dense<0.000000e+00> : vector<8xf32>
    %4 = vector.multi_reduction <add>, %3, %cst [1] : vector<8x4398xf32> to vector<8xf32>
    %5 = vector.shape_cast %4 : vector<8xf32> to vector<8x1xf32>
    %c0_3 = arith.constant 0 : index
    %c0_4 = arith.constant 0 : index
    %6 = vector.load %arg3[%c0_3, %c0_4] : memref<1x1xf32, #tpu.memory_space<vmem>>, vector<1x1xf32>
    %7 = vector.broadcast %6 : vector<1x1xf32> to vector<8x1xf32>
    %8 = arith.addf %5, %7 : vector<8x1xf32>
    %c0_5 = arith.constant 0 : index
    %c0_6 = arith.constant 0 : index
    %9 = vector.load %arg4[%c0_5, %c0_6] : memref<8x1xf32, #tpu.memory_space<vmem>>, vector<8x1xf32>
    tpu.vector_store %arg4[%c0_5, %c0_6], %8 {strides = array<i32>} : memref<8x1xf32, #tpu.memory_space<vmem>>, vector<8x1xf32>,
    return
  }
  func.func @transform_0(%arg0: i32) -> (i32, i32) {
    %c0_i32 = arith.constant 0 : i32
    %c0_i32_0 = arith.constant 0 : i32
    %c0_i32_1 = arith.constant 0 : i32
    return %c0_i32, %c0_i32_0 : i32, i32
  }
  func.func @transform_1(%arg0: i32) -> (i32, i32) {
    %c0_i32 = arith.constant 0 : i32
    %c0_i32_0 = arith.constant 0 : i32
    %c0_i32_1 = arith.constant 0 : i32
    return %c0_i32, %c0_i32_0 : i32, i32
  }
  func.func @transform_2(%arg0: i32) -> (i32, i32) {
    %c0_i32 = arith.constant 0 : i32
    %c0_i32_0 = arith.constant 0 : i32
    %c0_i32_1 = arith.constant 0 : i32
    return %c0_i32, %c0_i32_0 : i32, i32
  }
  func.func @transform_3(%arg0: i32) -> (i32, i32) {
    %c0_i32 = arith.constant 0 : i32
    %c0_i32_0 = arith.constant 0 : i32
    %c0_i32_1 = arith.constant 0 : i32
    return %c0_i32, %c0_i32_0 : i32, i32
  }
}

</mosaic_0001>

<llo_original>
// kernel: network_forward.1
$region0: #{network_forward.1}
  #allocation0 [shape = 'u32[]', space=smem, size = 0x4, offset = 0x4, fixed_abs, tag = 'smem constant byte address 0x4 - core index']
  #allocation1 [shape = 'u32[144,128]{1,0:T(1,128)}', space=vmem, size = 0x12000, scoped, tag = 'internal scratch']
  #allocation2 [shape = 'f32[1,1]{1,0:T(1,128)S(1)}', space=vmem, size = 0x200, scoped, tag = 'scoped memory for network_forward.1']
  %s0 = inlined_call_operand.hbm [shape: f32[8,4398], index: 0, kind: input, shape index: {}]
  %s1 = inlined_call_operand.hbm [shape: f32[1,4398], index: 1, kind: input, shape index: {}]
  %s2 = inlined_call_operand.<no memory space> [shape: f32[1,1], index: 2, kind: input, shape index: {}]
  %s3 = inlined_call_operand.vmem [shape: f32[8,1], index: 3, kind: output, shape index: {}]
  %s4 = sld [smem:[#allocation0]]
  $region30: #{network_forward.1} parent=0
    _
  %s6 = ssub.s32 1, %s4
  %s7 = scalar_select 0, %s6, %s4
  %v8 = vstv %s2
  %9 = vst [vmem:[#allocation2] sm:$0x1] %v8
  $region1: #{network_forward.1} parent=0
    #allocation3 [shape = 'u8[143360]{0}', space=vmem, size = 0x23000, scoped, tag = 'input window, operand 0, single buffered']
    #allocation4 [shape = 's32[1]{0}', space=sflag, size = 0x4, scoped, tag = 'scoped memory for network_forward.1']
    #allocation5 [shape = 'u8[17920]{0}', space=vmem, size = 0x4800, scoped, tag = 'input window, operand 1, single buffered']
    #allocation6 [shape = 's32[1]{0}', space=sflag, size = 0x4, scoped, tag = 'scoped memory for network_forward.1']
    %10 = vsyncpa [#allocation4], 0
    %11 = vsyncpa [#allocation6], 0
    // Predicated region
    $region2: #{network_forward.1} parent=1 // pred_check
      _
    $region3: #{network_forward.1} parent=1 // pred_check_branch
      %13 = sbr.rel (0) target = $region5
    $region4: #{network_forward.1} parent=1 // pred_region
      %s15 = ssub.s32 4480, 4480
      %16 = vsyncadd [#allocation4], %s15
      %s18 = sshll.u32 [#allocation3], 4
      %s19 = int_to_ptr.vmem [resolvable:$true] %s18
      %21 = dma.hbm_to_vmem [thread:$0]  %s0, 4480, %s19, [#allocation4]
    $region5: #{network_forward.1} parent=1 // pred_fallthru
      _
    // Predicated region
    $region6: #{network_forward.1} parent=1 // pred_check
      _
    $region7: #{network_forward.1} parent=1 // pred_check_branch
      %23 = sbr.rel (0) target = $region9
    $region8: #{network_forward.1} parent=1 // pred_region
      %s25 = ssub.s32 560, 560
      %26 = vsyncadd [#allocation6], %s25
      %s28 = sshll.u32 [#allocation5], 4
      %s29 = int_to_ptr.vmem [resolvable:$true] %s28
      %31 = dma.hbm_to_vmem [thread:$0]  %s1, 560, %s29, [#allocation6]
    $region9: #{network_forward.1} parent=1 // pred_fallthru
      _
    // Predicated region
    $region10: #{network_forward.1} parent=1 // pred_check
      _
    $region11: #{network_forward.1} parent=1 // pred_check_branch
      %33 = sbr.rel (0) target = $region13
    $region12: #{network_forward.1} parent=1 // pred_region
      _
    $region13: #{network_forward.1} parent=1 // pred_fallthru
      _
    // Predicated region
    $region14: #{network_forward.1} parent=1 // pred_check
      _
    $region15: #{network_forward.1} parent=1 // pred_check_branch
      %35 = sbr.rel (0) target = $region17
    $region16: #{network_forward.1} parent=1 // pred_region
      %36 = dma.done [#allocation4], 4480
    $region17: #{network_forward.1} parent=1 // pred_fallthru
      _
    // Predicated region
    $region18: #{network_forward.1} parent=1 // pred_check
      _
    $region19: #{network_forward.1} parent=1 // pred_check_branch
      %38 = sbr.rel (0) target = $region21
    $region20: #{network_forward.1} parent=1 // pred_region
      %39 = dma.done [#allocation6], 560
    $region21: #{network_forward.1} parent=1 // pred_fallthru
      _
    %v40 = vld [vmem:[#allocation3] sm:$0xff]
    %v41 = vld [vmem:[#allocation3 + $0x8] sm:$0xff]
    %v42 = vld [vmem:[#allocation3 + $0x10] sm:$0xff]
    %v43 = vld [vmem:[#allocation3 + $0x18] sm:$0xff]
    %v44 = vld [vmem:[#allocation3 + $0x20] sm:$0xff]
    %v45 = vld [vmem:[#allocation3 + $0x28] sm:$0xff]
    %v46 = vld [vmem:[#allocation3 + $0x30] sm:$0xff]
    %v47 = vld [vmem:[#allocation3 + $0x38] sm:$0xff]
    %v48 = vld [vmem:[#allocation3 + $0x40] sm:$0xff]
    %v49 = vld [vmem:[#allocation3 + $0x48] sm:$0xff]
    %v50 = vld [vmem:[#allocation3 + $0x50] sm:$0xff]
    %v51 = vld [vmem:[#allocation3 + $0x58] sm:$0xff]
    %v52 = vld [vmem:[#allocation3 + $0x60] sm:$0xff]
    %v53 = vld [vmem:[#allocation3 + $0x68] sm:$0xff]
    %v54 = vld [vmem:[#allocation3 + $0x70] sm:$0xff]
    %v55 = vld [vmem:[#allocation3 + $0x78] sm:$0xff]
    %v56 = vld [vmem:[#allocation3 + $0x80] sm:$0xff]
    %v57 = vld [vmem:[#allocation3 + $0x88] sm:$0xff]
    %v58 = vld [vmem:[#allocation3 + $0x90] sm:$0xff]
    %v59 = vld [vmem:[#allocation3 + $0x98] sm:$0xff]
    %v60 = vld [vmem:[#allocation3 + $0xa0] sm:$0xff]
    %v61 = vld [vmem:[#allocation3 + $0xa8] sm:$0xff]
    %v62 = vld [vmem:[#allocation3 + $0xb0] sm:$0xff]
    %v63 = vld [vmem:[#allocation3 + $0xb8] sm:$0xff]
    %v64 = vld [vmem:[#allocation3 + $0xc0] sm:$0xff]
    %v65 = vld [vmem:[#allocation3 + $0xc8] sm:$0xff]
    %v66 = vld [vmem:[#allocation3 + $0xd0] sm:$0xff]
    %v67 = vld [vmem:[#allocation3 + $0xd8] sm:$0xff]
    %v68 = vld [vmem:[#allocation3 + $0xe0] sm:$0xff]
    %v69 = vld [vmem:[#allocation3 + $0xe8] sm:$0xff]
    %v70 = vld [vmem:[#allocation3 + $0xf0] sm:$0xff]
    %v71 = vld [vmem:[#allocation3 + $0xf8] sm:$0xff]
    %v72 = vld [vmem:[#allocation3 + $0x100] sm:$0xff]
    %v73 = vld [vmem:[#allocation3 + $0x108] sm:$0xff]
    %v74 = vld [vmem:[#allocation3 + $0x110] sm:$0xff]
    %v75 = vld [vmem:[#allocation5] sm:$0xff]
    %v76 = vld [vmem:[#allocation5 + $0x8] sm:$0xff]
    %v77 = vld [vmem:[#allocation5 + $0x10] sm:$0xff]
    %v78 = vld [vmem:[#allocation5 + $0x18] sm:$0xff]
    %v79 = vld [vmem:[#allocation5 + $0x20] sm:$0x7]
    %v85 = vlaneseq
    %v86 = vshrl.u32 %v85, 7
    %v87 = vsub.s32 0, %v86
    %v88 = vrot.slane %v75, %v87
    %v89 = vlaneseq
    %v90 = vshrl.u32 %v89, 7
    %v91 = vsub.s32 1, %v90
    %v92 = vrot.slane %v75, %v91
    %v93 = vlaneseq
    %v94 = vshrl.u32 %v93, 7
    %v95 = vsub.s32 2, %v94
    %v96 = vrot.slane %v75, %v95
    %v97 = vlaneseq
    %v98 = vshrl.u32 %v97, 7
    %v99 = vsub.s32 3, %v98
    %v100 = vrot.slane %v75, %v99
    %v101 = vlaneseq
    %v102 = vshrl.u32 %v101, 7
    %v103 = vsub.s32 4, %v102
    %v104 = vrot.slane %v75, %v103
    %v105 = vlaneseq
    %v106 = vshrl.u32 %v105, 7
    %v107 = vsub.s32 5, %v106
    %v108 = vrot.slane %v75, %v107
    %v109 = vlaneseq
    %v110 = vshrl.u32 %v109, 7
    %v111 = vsub.s32 6, %v110
    %v112 = vrot.slane %v75, %v111
    %v113 = vlaneseq
    %v114 = vshrl.u32 %v113, 7
    %v115 = vsub.s32 7, %v114
    %v116 = vrot.slane %v75, %v115
    %v117 = vlaneseq
    %v118 = vshrl.u32 %v117, 7
    %v119 = vsub.s32 0, %v118
    %v120 = vrot.slane %v76, %v119
    %v121 = vlaneseq
    %v122 = vshrl.u32 %v121, 7
    %v123 = vsub.s32 1, %v122
    %v124 = vrot.slane %v76, %v123
    %v125 = vlaneseq
    %v126 = vshrl.u32 %v125, 7
    %v127 = vsub.s32 2, %v126
    %v128 = vrot.slane %v76, %v127
    %v129 = vlaneseq
    %v130 = vshrl.u32 %v129, 7
    %v131 = vsub.s32 3, %v130
    %v132 = vrot.slane %v76, %v131
    %v133 = vlaneseq
    %v134 = vshrl.u32 %v133, 7
    %v135 = vsub.s32 4, %v134
    %v136 = vrot.slane %v76, %v135
    %v137 = vlaneseq
    %v138 = vshrl.u32 %v137, 7
    %v139 = vsub.s32 5, %v138
    %v140 = vrot.slane %v76, %v139
    %v141 = vlaneseq
    %v142 = vshrl.u32 %v141, 7
    %v143 = vsub.s32 6, %v142
    %v144 = vrot.slane %v76, %v143
    %v145 = vlaneseq
    %v146 = vshrl.u32 %v145, 7
    %v147 = vsub.s32 7, %v146
    %v148 = vrot.slane %v76, %v147
    %v149 = vlaneseq
    %v150 = vshrl.u32 %v149, 7
    %v151 = vsub.s32 0, %v150
    %v152 = vrot.slane %v77, %v151
    %v153 = vlaneseq
    %v154 = vshrl.u32 %v153, 7
    %v155 = vsub.s32 1, %v154
    %v156 = vrot.slane %v77, %v155
    %v157 = vlaneseq
    %v158 = vshrl.u32 %v157, 7
    %v159 = vsub.s32 2, %v158
    %v160 = vrot.slane %v77, %v159
    %v161 = vlaneseq
    %v162 = vshrl.u32 %v161, 7
    %v163 = vsub.s32 3, %v162
    %v164 = vrot.slane %v77, %v163
    %v165 = vlaneseq
    %v166 = vshrl.u32 %v165, 7
    %v167 = vsub.s32 4, %v166
    %v168 = vrot.slane %v77, %v167
    %v169 = vlaneseq
    %v170 = vshrl.u32 %v169, 7
    %v171 = vsub.s32 5, %v170
    %v172 = vrot.slane %v77, %v171
    %v173 = vlaneseq
    %v174 = vshrl.u32 %v173, 7
    %v175 = vsub.s32 6, %v174
    %v176 = vrot.slane %v77, %v175
    %v177 = vlaneseq
    %v178 = vshrl.u32 %v177, 7
    %v179 = vsub.s32 7, %v178
    %v180 = vrot.slane %v77, %v179
    %v181 = vlaneseq
    %v182 = vshrl.u32 %v181, 7
    %v183 = vsub.s32 0, %v182
    %v184 = vrot.slane %v78, %v183
    %v185 = vlaneseq
    %v186 = vshrl.u32 %v185, 7
    %v187 = vsub.s32 1, %v186
    %v188 = vrot.slane %v78, %v187
    %v189 = vlaneseq
    %v190 = vshrl.u32 %v189, 7
    %v191 = vsub.s32 2, %v190
    %v192 = vrot.slane %v78, %v191
    %v193 = vlaneseq
    %v194 = vshrl.u32 %v193, 7
    %v195 = vsub.s32 3, %v194
    %v196 = vrot.slane %v78, %v195
    %v197 = vlaneseq
    %v198 = vshrl.u32 %v197, 7
    %v199 = vsub.s32 4, %v198
    %v200 = vrot.slane %v78, %v199
    %v201 = vlaneseq
    %v202 = vshrl.u32 %v201, 7
    %v203 = vsub.s32 5, %v202
    %v204 = vrot.slane %v78, %v203
    %v205 = vlaneseq
    %v206 = vshrl.u32 %v205, 7
    %v207 = vsub.s32 6, %v206
    %v208 = vrot.slane %v78, %v207
    %v209 = vlaneseq
    %v210 = vshrl.u32 %v209, 7
    %v211 = vsub.s32 7, %v210
    %v212 = vrot.slane %v78, %v211
    %v213 = vlaneseq
    %v214 = vshrl.u32 %v213, 7
    %v215 = vsub.s32 0, %v214
    %v216 = vrot.slane %v79, %v215
    %v217 = vlaneseq
    %v218 = vshrl.u32 %v217, 7
    %v219 = vsub.s32 1, %v218
    %v220 = vrot.slane %v79, %v219
    %v221 = vlaneseq
    %v222 = vshrl.u32 %v221, 7
    %v223 = vsub.s32 2, %v222
    %v224 = vrot.slane %v79, %v223
    %v260 = vmul.f32 %v40, %v88
    %v261 = vmul.f32 %v41, %v92
    %v262 = vmul.f32 %v42, %v96
    %v263 = vmul.f32 %v43, %v100
    %v264 = vmul.f32 %v44, %v104
    %v265 = vmul.f32 %v45, %v108
    %v266 = vmul.f32 %v46, %v112
    %v267 = vmul.f32 %v47, %v116
    %v268 = vmul.f32 %v48, %v120
    %v269 = vmul.f32 %v49, %v124
    %v270 = vmul.f32 %v50, %v128
    %v271 = vmul.f32 %v51, %v132
    %v272 = vmul.f32 %v52, %v136
    %v273 = vmul.f32 %v53, %v140
    %v274 = vmul.f32 %v54, %v144
    %v275 = vmul.f32 %v55, %v148
    %v276 = vmul.f32 %v56, %v152
    %v277 = vmul.f32 %v57, %v156
    %v278 = vmul.f32 %v58, %v160
    %v279 = vmul.f32 %v59, %v164
    %v280 = vmul.f32 %v60, %v168
    %v281 = vmul.f32 %v61, %v172
    %v282 = vmul.f32 %v62, %v176
    %v283 = vmul.f32 %v63, %v180
    %v284 = vmul.f32 %v64, %v184
    %v285 = vmul.f32 %v65, %v188
    %v286 = vmul.f32 %v66, %v192
    %v287 = vmul.f32 %v67, %v196
    %v288 = vmul.f32 %v68, %v200
    %v289 = vmul.f32 %v69, %v204
    %v290 = vmul.f32 %v70, %v208
    %v291 = vmul.f32 %v71, %v212
    %v292 = vmul.f32 %v72, %v216
    %v293 = vmul.f32 %v73, %v220
    %v294 = vmul.f32 %v74, %v224
    %v295 = vadd.f32 %v260, %v261
    %v296 = vadd.f32 %v295, %v262
    %v297 = vadd.f32 %v296, %v263
    %v298 = vadd.f32 %v297, %v264
    %v299 = vadd.f32 %v298, %v265
    %v300 = vadd.f32 %v299, %v266
    %v301 = vadd.f32 %v300, %v267
    %v302 = vadd.f32 %v301, %v268
    %v303 = vadd.f32 %v302, %v269
    %v304 = vadd.f32 %v303, %v270
    %v305 = vadd.f32 %v304, %v271
    %v306 = vadd.f32 %v305, %v272
    %v307 = vadd.f32 %v306, %v273
    %v308 = vadd.f32 %v307, %v274
    %v309 = vadd.f32 %v308, %v275
    %v310 = vadd.f32 %v309, %v276
    %v311 = vadd.f32 %v310, %v277
    %v312 = vadd.f32 %v311, %v278
    %v313 = vadd.f32 %v312, %v279
    %v314 = vadd.f32 %v313, %v280
    %v315 = vadd.f32 %v314, %v281
    %v316 = vadd.f32 %v315, %v282
    %v317 = vadd.f32 %v316, %v283
    %v318 = vadd.f32 %v317, %v284
    %v319 = vadd.f32 %v318, %v285
    %v320 = vadd.f32 %v319, %v286
    %v321 = vadd.f32 %v320, %v287
    %v322 = vadd.f32 %v321, %v288
    %v323 = vadd.f32 %v322, %v289
    %v324 = vadd.f32 %v323, %v290
    %v325 = vadd.f32 %v324, %v291
    %v326 = vadd.f32 %v325, %v292
    %v327 = vadd.f32 %v326, %v293
    %vm328 = vcmask 375808
    %v329 = vsel %vm328, %v294, 0.0
    %v330 = vadd.f32 %v327, %v329
    %331 = vadd.xlane.f32.xlu0 %v330
    %v332 = vpop.xlane.xlu0 %331
    %v333 = vld [vmem:[#allocation2] sm:$0x1]
    %v335 = vlaneseq
    %v336 = vshrl.u32 %v335, 7
    %v337 = vsub.s32 0, %v336
    %v338 = vrot.slane %v333, %v337
    %v340 = vadd.f32 %v332, %v338
    %vm341 = vcmask 7168
    %342 = vst.msk [vmem:[%s3] sm:$0xff] %vm341, %v340
    // Predicated region
    $region22: #{network_forward.1} parent=1 // pred_check
      _
    $region23: #{network_forward.1} parent=1 // pred_check_branch
      %344 = sbr.rel (0) target = $region25
    $region24: #{network_forward.1} parent=1 // pred_region
      _
    $region25: #{network_forward.1} parent=1 // pred_fallthru
      _
    // Predicated region
    $region26: #{network_forward.1} parent=1 // pred_check
      _
    $region27: #{network_forward.1} parent=1 // pred_check_branch
      %346 = sbr.rel (0) target = $region29
    $region28: #{network_forward.1} parent=1 // pred_region
      _
    $region29: #{network_forward.1} parent=1 // pred_fallthru
      _
    %347 = vsyncpa [#allocation4], 1
    %348 = vsyncpa [#allocation6], 1

</llo_original>
